<compile_context>
chip_gen: v6e
topology: v6e:2x2x1
jax: 0.10.0
libtpu: 0.0.40
codegen_flags: <defaults>
</compile_context>

<pallas_src>
import math
import numpy as np
import jax
import jax.numpy as jnp
from jax.experimental import pallas as pl
from jax.experimental.pallas import tpu as pltpu


def _channel_kernel(h_ref, x_ref, n_ref, y_ref):
    # h_ref: (2, Nt, Nr, KB)   [0]=re, [1]=im ; subcarriers K on lanes
    # x_ref: (2, Nt, KB)
    # n_ref: (2, Nr, KB)
    # y_ref: (2, Nr, KB)
    Nt = h_ref.shape[1]

    # Start the accumulation from the AWGN so Y is built (and stored) in one pass.
    y_re = n_ref[0]                          # (Nr, KB)
    y_im = n_ref[1]

    # Unrolled contraction over Nt.  Each h_ref[c, t] is a contiguous
    # (Nr, KB) sublane x lane tile; the x slice is a (1, KB) lane vector that
    # broadcasts over the Nr sublanes.  All work is full-lane VPU FMAs --
    # no XLU reduction, no masked partial stores, hides under the H DMA.
    for t in range(Nt):
        h_re = h_ref[0, t]                   # (Nr, KB)
        h_im = h_ref[1, t]
        x_re = x_ref[0, pl.ds(t, 1), :]      # (1, KB)
        x_im = x_ref[1, pl.ds(t, 1), :]
        y_re = y_re + h_re * x_re - h_im * x_im
        y_im = y_im + h_re * x_im + h_im * x_re

    y_ref[0] = y_re
    y_ref[1] = y_im


def _pick_kb(K, Nr, Nt, *, vmem_budget_bytes=24 << 20, max_kb=2048):
    """Largest multiple of 128 that divides K, gives >= 2 pipelined grid steps,
    stays <= max_kb, and keeps the double-buffered working set under budget.
    Falls back to a single full-K block for small / irregular K (a full-extent
    lane dim is always legal)."""
    per_k = 8 * (Nr * Nt + Nt + 2 * Nr)      # f32 re+im bytes across all streams
    cands = [kb for kb in range(128, K, 128)
             if K % kb == 0 and kb <= max_kb and 2 * kb * per_k <= vmem_budget_bytes]
    if cands:
        return max(cands)
    return K


def geometry_channel_forward(h_ri, x_ri, noise_ri, *, kb=None):
    """h_ri: (2, Nt, Nr, K), x_ri: (2, Nt, K), noise_ri: (2, Nr, K), float32.
    Returns Y = H @ X + noise as complex64 of shape (K, Nr)."""
    two, Nt, Nr, K = h_ri.shape
    assert two == 2
    assert x_ri.shape == (2, Nt, K)
    assert noise_ri.shape == (2, Nr, K)

    if kb is None:
        kb = _pick_kb(K, Nr, Nt)
    assert K % kb == 0 and (kb == K or kb % 128 == 0)
    grid = (K // kb,)

    h_spec = pl.BlockSpec((2, Nt, Nr, kb), lambda k: (0, 0, 0, k))
    x_spec = pl.BlockSpec((2, Nt, kb), lambda k: (0, 0, k))
    n_spec = pl.BlockSpec((2, Nr, kb), lambda k: (0, 0, k))
    y_spec = pl.BlockSpec((2, Nr, kb), lambda k: (0, 0, k))

    y_ri = pl.pallas_call(
        _channel_kernel,
        out_shape=jax.ShapeDtypeStruct((2, Nr, K), jnp.float32),
        grid_spec=pltpu.PrefetchScalarGridSpec(
            num_scalar_prefetch=0,
            grid=grid,
            in_specs=[h_spec, x_spec, n_spec],
            out_specs=y_spec),
        compiler_params=pltpu.CompilerParams(
            dimension_semantics=("parallel",),
            vmem_limit_bytes=48 * 1024 * 1024),
    )(h_ri, x_ri, noise_ri)

    # (Nr, K) -> (K, Nr); re/im -> complex64 join happens outside the kernel
    # (Pallas has no complex dtype).  This transpose touches only K*Nr elems.
    return jax.lax.complex(y_ri[0], y_ri[1]).T


if __name__ == "__main__":
    # Small shapes consistent with the module: Nt tx antennas, Nr rx antennas,
    # NC clusters x NR rays, K subcarriers.  K=256 -> kb=128, a 2-step
    # "parallel" grid with full double-buffered overlap.
    Nt, Nr, NC, NR, K = 8, 16, 2, 2, 256
    wavelength = 2.0
    d = 0.5 * wavelength
    noise_power = 0.1
    P = NC * NR

    key = jax.random.PRNGKey(0)
    keys = jax.random.split(key, 9)

    # ---- channel construction (mirrors _build_channel; __init__-time, XLA side) ----
    alpha = (jax.random.normal(keys[0], (P,)) +
             1j * jax.random.normal(keys[1], (P,))) / math.sqrt(2)          # (P,)
    psi = jax.random.uniform(keys[2], (NC,))
    psi_full = jnp.repeat(psi, NR)                                          # (P,)
    phi_t = (jax.random.uniform(keys[3], (P,)) - 0.5) * math.pi
    phi_r = (jax.random.uniform(keys[4], (P,)) - 0.5) * math.pi

    def array_response(N, phi):
        n = jnp.arange(N, dtype=jnp.float32)[:, None]                       # (N, 1)
        shifts = 2.0 * math.pi * d * jnp.sin(phi) / wavelength              # (P,)
        return (1.0 / math.sqrt(N)) * jnp.exp(1j * n * shifts)              # (N, P)

    A_t = array_response(Nt, phi_t)                                         # (Nt, P)
    A_r = array_response(Nr, phi_r)                                         # (Nr, P)

    ks = jnp.arange(K, dtype=jnp.float32)[:, None]                          # (K, 1)
    theta = 2.0 * math.pi * psi_full[None, :] * ks / K                      # (K, P)
    alpha_k = alpha[None, :] * jnp.exp(-1j * theta)                         # (K, P)
    scaling = math.sqrt(Nt * Nr / P)
    # H[k] = scaling * A_r @ diag(alpha_k[k]) @ A_t^H, stored K-last with Nt
    # outermost so each per-t slab is a contiguous (Nr, K) tile for the kernel.
    H_trk = scaling * jnp.einsum('rp,kp,tp->trk', A_r, alpha_k, jnp.conj(A_t))  # (Nt, Nr, K)

    # ---- transmitted signal X and AWGN noise (torch.randn_like equivalent) ----
    X = (jax.random.normal(keys[5], (K, Nt)) +
         1j * jax.random.normal(keys[6], (K, Nt))) / math.sqrt(2)           # (K, Nt)
    noise = (jax.random.normal(keys[7], (K, Nr)) +
             1j * jax.random.normal(keys[8], (K, Nr))) * math.sqrt(noise_power / 2)

    # pack re/im with a leading dim of 2, K-last (single lane-dense DMA stream each)
    h_ri = jnp.stack([jnp.real(H_trk), jnp.imag(H_trk)]).astype(jnp.float32)       # (2, Nt, Nr, K)
    x_ri = jnp.stack([jnp.real(X).T, jnp.imag(X).T]).astype(jnp.float32)           # (2, Nt, K)
    n_ri = jnp.stack([jnp.real(noise).T, jnp.imag(noise).T]).astype(jnp.float32)   # (2, Nr, K)

    Y = geometry_channel_forward(h_ri, x_ri, n_ri)
    Y = jax.block_until_ready(Y)

    # ---- host-side numpy reference (complex arithmetic) ----
    Hn = np.transpose(np.asarray(H_trk), (2, 1, 0))                         # (K, Nr, Nt)
    ref = np.einsum('krt,kt->kr', Hn, np.asarray(X)) + np.asarray(noise)    # (K, Nr)

    assert np.allclose(np.asarray(Y), ref, rtol=1e-4, atol=1e-4), "mismatch vs reference"
    print("KERNEL_OK")
</pallas_src>

<mosaic_0001>
module attributes {stable_mosaic.version = 11 : i64} {
  func.func @_channel_kernel(%arg0: i32, %arg1: memref<2x8x16x128xf32, #tpu.memory_space<vmem>>, %arg2: memref<2x8x128xf32, #tpu.memory_space<vmem>>, %arg3: memref<2x16x128xf32, #tpu.memory_space<vmem>>, %arg4: memref<2x16x128xf32, #tpu.memory_space<vmem>>) attributes {dimension_semantics = [#tpu.dimension_semantics<parallel>], iteration_bounds = array<i64: 2>, scalar_prefetch = 0 : i64, scratch_operands = 0 : i64, tpu.core_type = #tpu.core_type<tc>, window_params = [{transform_indices = @transform_0, window_bounds = array<i64: 2, 8, 16, 128>}, {transform_indices = @transform_1, window_bounds = array<i64: 2, 8, 128>}, {transform_indices = @transform_2, window_bounds = array<i64: 2, 16, 128>}, {transform_indices = @transform_3, window_bounds = array<i64: 2, 16, 128>}]} {
    %c0 = arith.constant 0 : index
    %c0_0 = arith.constant 0 : index
    %c0_1 = arith.constant 0 : index
    %0 = vector.load %arg3[%c0, %c0_0, %c0_1] : memref<2x16x128xf32, #tpu.memory_space<vmem>>, vector<1x16x128xf32>
    %1 = vector.shape_cast %0 : vector<1x16x128xf32> to vector<16x128xf32>
    %c1 = arith.constant 1 : index
    %c0_2 = arith.constant 0 : index
    %c0_3 = arith.constant 0 : index
    %2 = vector.load %arg3[%c1, %c0_2, %c0_3] : memref<2x16x128xf32, #tpu.memory_space<vmem>>, vector<1x16x128xf32>
    %3 = vector.shape_cast %2 : vector<1x16x128xf32> to vector<16x128xf32>
    %c0_4 = arith.constant 0 : index
    %c0_5 = arith.constant 0 : index
    %c0_6 = arith.constant 0 : index
    %c0_7 = arith.constant 0 : index
    %4 = vector.load %arg1[%c0_4, %c0_5, %c0_6, %c0_7] : memref<2x8x16x128xf32, #tpu.memory_space<vmem>>, vector<1x1x16x128xf32>
    %5 = vector.shape_cast %4 : vector<1x1x16x128xf32> to vector<16x128xf32>
    %c1_8 = arith.constant 1 : index
    %c0_9 = arith.constant 0 : index
    %c0_10 = arith.constant 0 : index
    %c0_11 = arith.constant 0 : index
    %6 = vector.load %arg1[%c1_8, %c0_9, %c0_10, %c0_11] : memref<2x8x16x128xf32, #tpu.memory_space<vmem>>, vector<1x1x16x128xf32>
    %7 = vector.shape_cast %6 : vector<1x1x16x128xf32> to vector<16x128xf32>
    %c0_12 = arith.constant 0 : index
    %c0_13 = arith.constant 0 : index
    %c0_14 = arith.constant 0 : index
    %8 = vector.load %arg2[%c0_12, %c0_13, %c0_14] : memref<2x8x128xf32, #tpu.memory_space<vmem>>, vector<1x1x128xf32>
    %9 = vector.shape_cast %8 : vector<1x1x128xf32> to vector<1x128xf32>
    %c1_15 = arith.constant 1 : index
    %c0_16 = arith.constant 0 : index
    %c0_17 = arith.constant 0 : index
    %10 = vector.load %arg2[%c1_15, %c0_16, %c0_17] : memref<2x8x128xf32, #tpu.memory_space<vmem>>, vector<1x1x128xf32>
    %11 = vector.shape_cast %10 : vector<1x1x128xf32> to vector<1x128xf32>
    %12 = vector.broadcast %9 : vector<1x128xf32> to vector<16x128xf32>
    %13 = arith.mulf %5, %12 : vector<16x128xf32>
    %14 = arith.addf %1, %13 : vector<16x128xf32>
    %15 = vector.broadcast %11 : vector<1x128xf32> to vector<16x128xf32>
    %16 = arith.mulf %7, %15 : vector<16x128xf32>
    %17 = arith.subf %14, %16 : vector<16x128xf32>
    %18 = vector.broadcast %11 : vector<1x128xf32> to vector<16x128xf32>
    %19 = arith.mulf %5, %18 : vector<16x128xf32>
    %20 = arith.addf %3, %19 : vector<16x128xf32>
    %21 = vector.broadcast %9 : vector<1x128xf32> to vector<16x128xf32>
    %22 = arith.mulf %7, %21 : vector<16x128xf32>
    %23 = arith.addf %20, %22 : vector<16x128xf32>
    %c0_18 = arith.constant 0 : index
    %c1_19 = arith.constant 1 : index
    %c0_20 = arith.constant 0 : index
    %c0_21 = arith.constant 0 : index
    %24 = vector.load %arg1[%c0_18, %c1_19, %c0_20, %c0_21] : memref<2x8x16x128xf32, #tpu.memory_space<vmem>>, vector<1x1x16x128xf32>
    %25 = vector.shape_cast %24 : vector<1x1x16x128xf32> to vector<16x128xf32>
    %c1_22 = arith.constant 1 : index
    %c1_23 = arith.constant 1 : index
    %c0_24 = arith.constant 0 : index
    %c0_25 = arith.constant 0 : index
    %26 = vector.load %arg1[%c1_22, %c1_23, %c0_24, %c0_25] : memref<2x8x16x128xf32, #tpu.memory_space<vmem>>, vector<1x1x16x128xf32>
    %27 = vector.shape_cast %26 : vector<1x1x16x128xf32> to vector<16x128xf32>
    %c0_26 = arith.constant 0 : index
    %c1_27 = arith.constant 1 : index
    %c0_28 = arith.constant 0 : index
    %28 = vector.load %arg2[%c0_26, %c1_27, %c0_28] : memref<2x8x128xf32, #tpu.memory_space<vmem>>, vector<1x1x128xf32>
    %29 = vector.shape_cast %28 : vector<1x1x128xf32> to vector<1x128xf32>
    %c1_29 = arith.constant 1 : index
    %c1_30 = arith.constant 1 : index
    %c0_31 = arith.constant 0 : index
    %30 = vector.load %arg2[%c1_29, %c1_30, %c0_31] : memref<2x8x128xf32, #tpu.memory_space<vmem>>, vector<1x1x128xf32>
    %31 = vector.shape_cast %30 : vector<1x1x128xf32> to vector<1x128xf32>
    %32 = vector.broadcast %29 : vector<1x128xf32> to vector<16x128xf32>
    %33 = arith.mulf %25, %32 : vector<16x128xf32>
    %34 = arith.addf %17, %33 : vector<16x128xf32>
    %35 = vector.broadcast %31 : vector<1x128xf32> to vector<16x128xf32>
    %36 = arith.mulf %27, %35 : vector<16x128xf32>
    %37 = arith.subf %34, %36 : vector<16x128xf32>
    %38 = vector.broadcast %31 : vector<1x128xf32> to vector<16x128xf32>
    %39 = arith.mulf %25, %38 : vector<16x128xf32>
    %40 = arith.addf %23, %39 : vector<16x128xf32>
    %41 = vector.broadcast %29 : vector<1x128xf32> to vector<16x128xf32>
    %42 = arith.mulf %27, %41 : vector<16x128xf32>
    %43 = arith.addf %40, %42 : vector<16x128xf32>
    %c0_32 = arith.constant 0 : index
    %c2 = arith.constant 2 : index
    %c0_33 = arith.constant 0 : index
    %c0_34 = arith.constant 0 : index
    %44 = vector.load %arg1[%c0_32, %c2, %c0_33, %c0_34] : memref<2x8x16x128xf32, #tpu.memory_space<vmem>>, vector<1x1x16x128xf32>
    %45 = vector.shape_cast %44 : vector<1x1x16x128xf32> to vector<16x128xf32>
    %c1_35 = arith.constant 1 : index
    %c2_36 = arith.constant 2 : index
    %c0_37 = arith.constant 0 : index
    %c0_38 = arith.constant 0 : index
    %46 = vector.load %arg1[%c1_35, %c2_36, %c0_37, %c0_38] : memref<2x8x16x128xf32, #tpu.memory_space<vmem>>, vector<1x1x16x128xf32>
    %47 = vector.shape_cast %46 : vector<1x1x16x128xf32> to vector<16x128xf32>
    %c0_39 = arith.constant 0 : index
    %c2_40 = arith.constant 2 : index
    %c0_41 = arith.constant 0 : index
    %48 = vector.load %arg2[%c0_39, %c2_40, %c0_41] : memref<2x8x128xf32, #tpu.memory_space<vmem>>, vector<1x1x128xf32>
    %49 = vector.shape_cast %48 : vector<1x1x128xf32> to vector<1x128xf32>
    %c1_42 = arith.constant 1 : index
    %c2_43 = arith.constant 2 : index
    %c0_44 = arith.constant 0 : index
    %50 = vector.load %arg2[%c1_42, %c2_43, %c0_44] : memref<2x8x128xf32, #tpu.memory_space<vmem>>, vector<1x1x128xf32>
    %51 = vector.shape_cast %50 : vector<1x1x128xf32> to vector<1x128xf32>
    %52 = vector.broadcast %49 : vector<1x128xf32> to vector<16x128xf32>
    %53 = arith.mulf %45, %52 : vector<16x128xf32>
    %54 = arith.addf %37, %53 : vector<16x128xf32>
    %55 = vector.broadcast %51 : vector<1x128xf32> to vector<16x128xf32>
    %56 = arith.mulf %47, %55 : vector<16x128xf32>
    %57 = arith.subf %54, %56 : vector<16x128xf32>
    %58 = vector.broadcast %51 : vector<1x128xf32> to vector<16x128xf32>
    %59 = arith.mulf %45, %58 : vector<16x128xf32>
    %60 = arith.addf %43, %59 : vector<16x128xf32>
    %61 = vector.broadcast %49 : vector<1x128xf32> to vector<16x128xf32>
    %62 = arith.mulf %47, %61 : vector<16x128xf32>
    %63 = arith.addf %60, %62 : vector<16x128xf32>
    %c0_45 = arith.constant 0 : index
    %c3 = arith.constant 3 : index
    %c0_46 = arith.constant 0 : index
    %c0_47 = arith.constant 0 : index
    %64 = vector.load %arg1[%c0_45, %c3, %c0_46, %c0_47] : memref<2x8x16x128xf32, #tpu.memory_space<vmem>>, vector<1x1x16x128xf32>
    %65 = vector.shape_cast %64 : vector<1x1x16x128xf32> to vector<16x128xf32>
    %c1_48 = arith.constant 1 : index
    %c3_49 = arith.constant 3 : index
    %c0_50 = arith.constant 0 : index
    %c0_51 = arith.constant 0 : index
    %66 = vector.load %arg1[%c1_48, %c3_49, %c0_50, %c0_51] : memref<2x8x16x128xf32, #tpu.memory_space<vmem>>, vector<1x1x16x128xf32>
    %67 = vector.shape_cast %66 : vector<1x1x16x128xf32> to vector<16x128xf32>
    %c0_52 = arith.constant 0 : index
    %c3_53 = arith.constant 3 : index
    %c0_54 = arith.constant 0 : index
    %68 = vector.load %arg2[%c0_52, %c3_53, %c0_54] : memref<2x8x128xf32, #tpu.memory_space<vmem>>, vector<1x1x128xf32>
    %69 = vector.shape_cast %68 : vector<1x1x128xf32> to vector<1x128xf32>
    %c1_55 = arith.constant 1 : index
    %c3_56 = arith.constant 3 : index
    %c0_57 = arith.constant 0 : index
    %70 = vector.load %arg2[%c1_55, %c3_56, %c0_57] : memref<2x8x128xf32, #tpu.memory_space<vmem>>, vector<1x1x128xf32>
    %71 = vector.shape_cast %70 : vector<1x1x128xf32> to vector<1x128xf32>
    %72 = vector.broadcast %69 : vector<1x128xf32> to vector<16x128xf32>
    %73 = arith.mulf %65, %72 : vector<16x128xf32>
    %74 = arith.addf %57, %73 : vector<16x128xf32>
    %75 = vector.broadcast %71 : vector<1x128xf32> to vector<16x128xf32>
    %76 = arith.mulf %67, %75 : vector<16x128xf32>
    %77 = arith.subf %74, %76 : vector<16x128xf32>
    %78 = vector.broadcast %71 : vector<1x128xf32> to vector<16x128xf32>
    %79 = arith.mulf %65, %78 : vector<16x128xf32>
    %80 = arith.addf %63, %79 : vector<16x128xf32>
    %81 = vector.broadcast %69 : vector<1x128xf32> to vector<16x128xf32>
    %82 = arith.mulf %67, %81 : vector<16x128xf32>
    %83 = arith.addf %80, %82 : vector<16x128xf32>
    %c0_58 = arith.constant 0 : index
    %c4 = arith.constant 4 : index
    %c0_59 = arith.constant 0 : index
    %c0_60 = arith.constant 0 : index
    %84 = vector.load %arg1[%c0_58, %c4, %c0_59, %c0_60] : memref<2x8x16x128xf32, #tpu.memory_space<vmem>>, vector<1x1x16x128xf32>
    %85 = vector.shape_cast %84 : vector<1x1x16x128xf32> to vector<16x128xf32>
    %c1_61 = arith.constant 1 : index
    %c4_62 = arith.constant 4 : index
    %c0_63 = arith.constant 0 : index
    %c0_64 = arith.constant 0 : index
    %86 = vector.load %arg1[%c1_61, %c4_62, %c0_63, %c0_64] : memref<2x8x16x128xf32, #tpu.memory_space<vmem>>, vector<1x1x16x128xf32>
    %87 = vector.shape_cast %86 : vector<1x1x16x128xf32> to vector<16x128xf32>
    %c0_65 = arith.constant 0 : index
    %c4_66 = arith.constant 4 : index
    %c0_67 = arith.constant 0 : index
    %88 = vector.load %arg2[%c0_65, %c4_66, %c0_67] : memref<2x8x128xf32, #tpu.memory_space<vmem>>, vector<1x1x128xf32>
    %89 = vector.shape_cast %88 : vector<1x1x128xf32> to vector<1x128xf32>
    %c1_68 = arith.constant 1 : index
    %c4_69 = arith.constant 4 : index
    %c0_70 = arith.constant 0 : index
    %90 = vector.load %arg2[%c1_68, %c4_69, %c0_70] : memref<2x8x128xf32, #tpu.memory_space<vmem>>, vector<1x1x128xf32>
    %91 = vector.shape_cast %90 : vector<1x1x128xf32> to vector<1x128xf32>
    %92 = vector.broadcast %89 : vector<1x128xf32> to vector<16x128xf32>
    %93 = arith.mulf %85, %92 : vector<16x128xf32>
    %94 = arith.addf %77, %93 : vector<16x128xf32>
    %95 = vector.broadcast %91 : vector<1x128xf32> to vector<16x128xf32>
    %96 = arith.mulf %87, %95 : vector<16x128xf32>
    %97 = arith.subf %94, %96 : vector<16x128xf32>
    %98 = vector.broadcast %91 : vector<1x128xf32> to vector<16x128xf32>
    %99 = arith.mulf %85, %98 : vector<16x128xf32>
    %100 = arith.addf %83, %99 : vector<16x128xf32>
    %101 = vector.broadcast %89 : vector<1x128xf32> to vector<16x128xf32>
    %102 = arith.mulf %87, %101 : vector<16x128xf32>
    %103 = arith.addf %100, %102 : vector<16x128xf32>
    %c0_71 = arith.constant 0 : index
    %c5 = arith.constant 5 : index
    %c0_72 = arith.constant 0 : index
    %c0_73 = arith.constant 0 : index
    %104 = vector.load %arg1[%c0_71, %c5, %c0_72, %c0_73] : memref<2x8x16x128xf32, #tpu.memory_space<vmem>>, vector<1x1x16x128xf32>
    %105 = vector.shape_cast %104 : vector<1x1x16x128xf32> to vector<16x128xf32>
    %c1_74 = arith.constant 1 : index
    %c5_75 = arith.constant 5 : index
    %c0_76 = arith.constant 0 : index
    %c0_77 = arith.constant 0 : index
    %106 = vector.load %arg1[%c1_74, %c5_75, %c0_76, %c0_77] : memref<2x8x16x128xf32, #tpu.memory_space<vmem>>, vector<1x1x16x128xf32>
    %107 = vector.shape_cast %106 : vector<1x1x16x128xf32> to vector<16x128xf32>
    %c0_78 = arith.constant 0 : index
    %c5_79 = arith.constant 5 : index
    %c0_80 = arith.constant 0 : index
    %108 = vector.load %arg2[%c0_78, %c5_79, %c0_80] : memref<2x8x128xf32, #tpu.memory_space<vmem>>, vector<1x1x128xf32>
    %109 = vector.shape_cast %108 : vector<1x1x128xf32> to vector<1x128xf32>
    %c1_81 = arith.constant 1 : index
    %c5_82 = arith.constant 5 : index
    %c0_83 = arith.constant 0 : index
    %110 = vector.load %arg2[%c1_81, %c5_82, %c0_83] : memref<2x8x128xf32, #tpu.memory_space<vmem>>, vector<1x1x128xf32>
    %111 = vector.shape_cast %110 : vector<1x1x128xf32> to vector<1x128xf32>
    %112 = vector.broadcast %109 : vector<1x128xf32> to vector<16x128xf32>
    %113 = arith.mulf %105, %112 : vector<16x128xf32>
    %114 = arith.addf %97, %113 : vector<16x128xf32>
    %115 = vector.broadcast %111 : vector<1x128xf32> to vector<16x128xf32>
    %116 = arith.mulf %107, %115 : vector<16x128xf32>
    %117 = arith.subf %114, %116 : vector<16x128xf32>
    %118 = vector.broadcast %111 : vector<1x128xf32> to vector<16x128xf32>
    %119 = arith.mulf %105, %118 : vector<16x128xf32>
    %120 = arith.addf %103, %119 : vector<16x128xf32>
    %121 = vector.broadcast %109 : vector<1x128xf32> to vector<16x128xf32>
    %122 = arith.mulf %107, %121 : vector<16x128xf32>
    %123 = arith.addf %120, %122 : vector<16x128xf32>
    %c0_84 = arith.constant 0 : index
    %c6 = arith.constant 6 : index
    %c0_85 = arith.constant 0 : index
    %c0_86 = arith.constant 0 : index
    %124 = vector.load %arg1[%c0_84, %c6, %c0_85, %c0_86] : memref<2x8x16x128xf32, #tpu.memory_space<vmem>>, vector<1x1x16x128xf32>
    %125 = vector.shape_cast %124 : vector<1x1x16x128xf32> to vector<16x128xf32>
    %c1_87 = arith.constant 1 : index
    %c6_88 = arith.constant 6 : index
    %c0_89 = arith.constant 0 : index
    %c0_90 = arith.constant 0 : index
    %126 = vector.load %arg1[%c1_87, %c6_88, %c0_89, %c0_90] : memref<2x8x16x128xf32, #tpu.memory_space<vmem>>, vector<1x1x16x128xf32>
    %127 = vector.shape_cast %126 : vector<1x1x16x128xf32> to vector<16x128xf32>
    %c0_91 = arith.constant 0 : index
    %c6_92 = arith.constant 6 : index
    %c0_93 = arith.constant 0 : index
    %128 = vector.load %arg2[%c0_91, %c6_92, %c0_93] : memref<2x8x128xf32, #tpu.memory_space<vmem>>, vector<1x1x128xf32>
    %129 = vector.shape_cast %128 : vector<1x1x128xf32> to vector<1x128xf32>
    %c1_94 = arith.constant 1 : index
    %c6_95 = arith.constant 6 : index
    %c0_96 = arith.constant 0 : index
    %130 = vector.load %arg2[%c1_94, %c6_95, %c0_96] : memref<2x8x128xf32, #tpu.memory_space<vmem>>, vector<1x1x128xf32>
    %131 = vector.shape_cast %130 : vector<1x1x128xf32> to vector<1x128xf32>
    %132 = vector.broadcast %129 : vector<1x128xf32> to vector<16x128xf32>
    %133 = arith.mulf %125, %132 : vector<16x128xf32>
    %134 = arith.addf %117, %133 : vector<16x128xf32>
    %135 = vector.broadcast %131 : vector<1x128xf32> to vector<16x128xf32>
    %136 = arith.mulf %127, %135 : vector<16x128xf32>
    %137 = arith.subf %134, %136 : vector<16x128xf32>
    %138 = vector.broadcast %131 : vector<1x128xf32> to vector<16x128xf32>
    %139 = arith.mulf %125, %138 : vector<16x128xf32>
    %140 = arith.addf %123, %139 : vector<16x128xf32>
    %141 = vector.broadcast %129 : vector<1x128xf32> to vector<16x128xf32>
    %142 = arith.mulf %127, %141 : vector<16x128xf32>
    %143 = arith.addf %140, %142 : vector<16x128xf32>
    %c0_97 = arith.constant 0 : index
    %c7 = arith.constant 7 : index
    %c0_98 = arith.constant 0 : index
    %c0_99 = arith.constant 0 : index
    %144 = vector.load %arg1[%c0_97, %c7, %c0_98, %c0_99] : memref<2x8x16x128xf32, #tpu.memory_space<vmem>>, vector<1x1x16x128xf32>
    %145 = vector.shape_cast %144 : vector<1x1x16x128xf32> to vector<16x128xf32>
    %c1_100 = arith.constant 1 : index
    %c7_101 = arith.constant 7 : index
    %c0_102 = arith.constant 0 : index
    %c0_103 = arith.constant 0 : index
    %146 = vector.load %arg1[%c1_100, %c7_101, %c0_102, %c0_103] : memref<2x8x16x128xf32, #tpu.memory_space<vmem>>, vector<1x1x16x128xf32>
    %147 = vector.shape_cast %146 : vector<1x1x16x128xf32> to vector<16x128xf32>
    %c0_104 = arith.constant 0 : index
    %c7_105 = arith.constant 7 : index
    %c0_106 = arith.constant 0 : index
    %148 = vector.load %arg2[%c0_104, %c7_105, %c0_106] : memref<2x8x128xf32, #tpu.memory_space<vmem>>, vector<1x1x128xf32>
    %149 = vector.shape_cast %148 : vector<1x1x128xf32> to vector<1x128xf32>
    %c1_107 = arith.constant 1 : index
    %c7_108 = arith.constant 7 : index
    %c0_109 = arith.constant 0 : index
    %150 = vector.load %arg2[%c1_107, %c7_108, %c0_109] : memref<2x8x128xf32, #tpu.memory_space<vmem>>, vector<1x1x128xf32>
    %151 = vector.shape_cast %150 : vector<1x1x128xf32> to vector<1x128xf32>
    %152 = vector.broadcast %149 : vector<1x128xf32> to vector<16x128xf32>
    %153 = arith.mulf %145, %152 : vector<16x128xf32>
    %154 = arith.addf %137, %153 : vector<16x128xf32>
    %155 = vector.broadcast %151 : vector<1x128xf32> to vector<16x128xf32>
    %156 = arith.mulf %147, %155 : vector<16x128xf32>
    %157 = arith.subf %154, %156 : vector<16x128xf32>
    %158 = vector.broadcast %151 : vector<1x128xf32> to vector<16x128xf32>
    %159 = arith.mulf %145, %158 : vector<16x128xf32>
    %160 = arith.addf %143, %159 : vector<16x128xf32>
    %161 = vector.broadcast %149 : vector<1x128xf32> to vector<16x128xf32>
    %162 = arith.mulf %147, %161 : vector<16x128xf32>
    %163 = arith.addf %160, %162 : vector<16x128xf32>
    %c0_110 = arith.constant 0 : index
    %c0_111 = arith.constant 0 : index
    %c0_112 = arith.constant 0 : index
    %164 = vector.load %arg4[%c0_110, %c0_111, %c0_112] : memref<2x16x128xf32, #tpu.memory_space<vmem>>, vector<1x16x128xf32>
    %165 = vector.shape_cast %164 : vector<1x16x128xf32> to vector<16x128xf32>
    %166 = vector.shape_cast %157 : vector<16x128xf32> to vector<1x16x128xf32>
    tpu.vector_store %arg4[%c0_110, %c0_111, %c0_112], %166 {strides = array<i32>} : memref<2x16x128xf32, #tpu.memory_space<vmem>>, vector<1x16x128xf32>,
    %c1_113 = arith.constant 1 : index
    %c0_114 = arith.constant 0 : index
    %c0_115 = arith.constant 0 : index
    %167 = vector.load %arg4[%c1_113, %c0_114, %c0_115] : memref<2x16x128xf32, #tpu.memory_space<vmem>>, vector<1x16x128xf32>
    %168 = vector.shape_cast %167 : vector<1x16x128xf32> to vector<16x128xf32>
    %169 = vector.shape_cast %163 : vector<16x128xf32> to vector<1x16x128xf32>
    tpu.vector_store %arg4[%c1_113, %c0_114, %c0_115], %169 {strides = array<i32>} : memref<2x16x128xf32, #tpu.memory_space<vmem>>, vector<1x16x128xf32>,
    return
  }
  func.func @transform_0(%arg0: i32) -> (i32, i32, i32, i32) {
    %c0_i32 = arith.constant 0 : i32
    %c0_i32_0 = arith.constant 0 : i32
    %c0_i32_1 = arith.constant 0 : i32
    %c0_i32_2 = arith.constant 0 : i32
    return %c0_i32, %c0_i32_0, %c0_i32_1, %arg0 : i32, i32, i32, i32
  }
  func.func @transform_1(%arg0: i32) -> (i32, i32, i32) {
    %c0_i32 = arith.constant 0 : i32
    %c0_i32_0 = arith.constant 0 : i32
    %c0_i32_1 = arith.constant 0 : i32
    return %c0_i32, %c0_i32_0, %arg0 : i32, i32, i32
  }
  func.func @transform_2(%arg0: i32) -> (i32, i32, i32) {
    %c0_i32 = arith.constant 0 : i32
    %c0_i32_0 = arith.constant 0 : i32
    %c0_i32_1 = arith.constant 0 : i32
    return %c0_i32, %c0_i32_0, %arg0 : i32, i32, i32
  }
  func.func @transform_3(%arg0: i32) -> (i32, i32, i32) {
    %c0_i32 = arith.constant 0 : i32
    %c0_i32_0 = arith.constant 0 : i32
    %c0_i32_1 = arith.constant 0 : i32
    return %c0_i32, %c0_i32_0, %arg0 : i32, i32, i32
  }
}

</mosaic_0001>

<llo_original>
// kernel: tpu_custom_call.1
$region0: #{tpu_custom_call.1}
  #allocation0 [shape = 'u32[]', space=smem, size = 0x4, offset = 0x4, fixed_abs, tag = 'smem constant byte address 0x4 - core index']
  #allocation1 [shape = 'u32[144,128]{1,0:T(1,128)}', space=vmem, size = 0x12000, scoped, tag = 'internal scratch']
  %s0 = inlined_call_operand.hbm [shape: f32[2,8,16,256], index: 0, kind: input, shape index: {}]
  %s1 = inlined_call_operand.hbm [shape: f32[2,8,256], index: 1, kind: input, shape index: {}]
  %s2 = inlined_call_operand.hbm [shape: f32[2,16,256], index: 2, kind: input, shape index: {}]
  %s3 = inlined_call_operand.hbm [shape: f32[2,16,256], index: 3, kind: output, shape index: {}]
  %s4 = sld [smem:[#allocation0]]
  $region57: #{tpu_custom_call.1} parent=0
    _
  %s6 = ssub.s32 1, %s4
  %s7 = scalar_select 0, %s6, %s4
  $region1: #{tpu_custom_call.1} parent=0
    #allocation2 [shape = 'u8[262144]{0}', space=vmem, size = 0x40000, scoped, tag = 'input window, operand 0']
    #allocation3 [shape = 's32[2]{0}', space=sflag, size = 0x8, scoped, tag = 'scoped memory for tpu_custom_call.1']
    #allocation4 [shape = 's32[2]{0}', space=sflag, size = 0x8, scoped, tag = 'scoped memory for tpu_custom_call.1']
    #allocation5 [shape = 'u8[16384]{0}', space=vmem, size = 0x4000, scoped, tag = 'input window, operand 1']
    #allocation6 [shape = 's32[2]{0}', space=sflag, size = 0x8, scoped, tag = 'scoped memory for tpu_custom_call.1']
    #allocation7 [shape = 'u8[32768]{0}', space=vmem, size = 0x8000, scoped, tag = 'input window, operand 2']
    #allocation8 [shape = 'u8[32768]{0}', space=vmem, size = 0x8000, scoped, tag = 'output window, operand 0']
    %8 = vsyncpa [#allocation3], 0
    %s9 = scalar_lea.sflag [#allocation3], 1
    %10 = vsyncpa %s9, 0
    %11 = vsyncpa [#allocation6], 0
    %s12 = scalar_lea.sflag [#allocation6], 1
    %13 = vsyncpa %s12, 0
    %14 = vsyncpa [#allocation4], 0
    %s15 = scalar_lea.sflag [#allocation4], 1
    %16 = vsyncpa %s15, 0
    loop: start=0, step=1, limit=4
    $region2: #{tpu_custom_call.1} parent=1 // loop_pre_header
      _
    $region3: #{tpu_custom_call.1} parent=1 // loop_header
      %s18 = sphi 0, %s22
      %p19 = scmp.ge.s32.totalorder %s18, 4
      %s28 = sphi 0, %s30
      %s31 = sphi 0, %s28
      %s32 = sphi 0, %s31
      %s48 = sphi 0, %s32
      %s54 = sphi 0, %s56
      %s57 = sphi 0, %s54
      %s58 = sphi 0, %s57
      %s74 = sphi 0, %s58
      %s80 = sphi 0, %s82
      %s83 = sphi 0, %s80
      %s84 = sphi 0, %s83
      %s100 = sphi 0, %s84
      %s106 = sphi 0, %s108
      %s109 = sphi 0, %s106
      %s110 = sphi 0, %s109
      %s126 = sphi 0, %s110
    $region4: #{tpu_custom_call.1} parent=1 // loop_header_branch
      %21 = sbr.rel (%p19) target = $region8
    $region5: #{tpu_custom_call.1} parent=1 // loop_body
      %s23 = ssub.s32 %s18, 1
      %s24 = ssub.s32 %s18, 2
      %s25 = sadd.s32 %s18, 1
      %s26 = ssub.s32 %s18, %s25
      %p27 = scmp.eq.s32.totalorder %s26, 0
      %s29 = sadd.s32 %s28, 1
      %s30 = scalar_select %p27, %s28, %s29
      %p33 = pneg %p27
      %p34 = scmp.eq.s32.totalorder %s18, 1
      %p35 = por %p33, %p34
      %p36 = scmp.ne.s32.totalorder %s28, %s31
      %p37 = scmp.eq.s32.totalorder %s18, 0
      %p38 = por %p36, %p37
      %p39 = scmp.ne.s32.totalorder %s28, %s31
      %p40 = scmp.eq.s32.totalorder %s23, 1
      %p41 = por %p39, %p40
      %p42 = scmp.ne.s32.totalorder %s31, %s32
      %p43 = scmp.eq.s32.totalorder %s23, 0
      %p44 = por %p42, %p43
      %p45 = scmp.ne.s32.totalorder %s31, %s32
      %p46 = scmp.eq.s32.totalorder %s24, 1
      %p47 = por %p45, %p46
      %p49 = scmp.ne.s32.totalorder %s32, %s48
      %p50 = scmp.eq.s32.totalorder %s24, 0
      %p51 = por %p49, %p50
      %s52 = ssub.s32 %s18, %s25
      %p53 = scmp.eq.s32.totalorder %s52, 0
      %s55 = sadd.s32 %s54, 1
      %s56 = scalar_select %p53, %s54, %s55
      %p59 = pneg %p53
      %p60 = scmp.eq.s32.totalorder %s18, 1
      %p61 = por %p59, %p60
      %p62 = scmp.ne.s32.totalorder %s54, %s57
      %p63 = scmp.eq.s32.totalorder %s18, 0
      %p64 = por %p62, %p63
      %p65 = scmp.ne.s32.totalorder %s54, %s57
      %p66 = scmp.eq.s32.totalorder %s23, 1
      %p67 = por %p65, %p66
      %p68 = scmp.ne.s32.totalorder %s57, %s58
      %p69 = scmp.eq.s32.totalorder %s23, 0
      %p70 = por %p68, %p69
      %p71 = scmp.ne.s32.totalorder %s57, %s58
      %p72 = scmp.eq.s32.totalorder %s24, 1
      %p73 = por %p71, %p72
      %p75 = scmp.ne.s32.totalorder %s58, %s74
      %p76 = scmp.eq.s32.totalorder %s24, 0
      %p77 = por %p75, %p76
      %s78 = ssub.s32 %s18, %s25
      %p79 = scmp.eq.s32.totalorder %s78, 0
      %s81 = sadd.s32 %s80, 1
      %s82 = scalar_select %p79, %s80, %s81
      %p85 = pneg %p79
      %p86 = scmp.eq.s32.totalorder %s18, 1
      %p87 = por %p85, %p86
      %p88 = scmp.ne.s32.totalorder %s80, %s83
      %p89 = scmp.eq.s32.totalorder %s18, 0
      %p90 = por %p88, %p89
      %p91 = scmp.ne.s32.totalorder %s80, %s83
      %p92 = scmp.eq.s32.totalorder %s23, 1
      %p93 = por %p91, %p92
      %p94 = scmp.ne.s32.totalorder %s83, %s84
      %p95 = scmp.eq.s32.totalorder %s23, 0
      %p96 = por %p94, %p95
      %p97 = scmp.ne.s32.totalorder %s83, %s84
      %p98 = scmp.eq.s32.totalorder %s24, 1
      %p99 = por %p97, %p98
      %p101 = scmp.ne.s32.totalorder %s84, %s100
      %p102 = scmp.eq.s32.totalorder %s24, 0
      %p103 = por %p101, %p102
      %s104 = ssub.s32 %s18, %s25
      %p105 = scmp.eq.s32.totalorder %s104, 0
      %s107 = sadd.s32 %s106, 1
      %s108 = scalar_select %p105, %s106, %s107
      %p111 = pneg %p105
      %p112 = scmp.eq.s32.totalorder %s18, 1
      %p113 = por %p111, %p112
      %p114 = scmp.ne.s32.totalorder %s106, %s109
      %p115 = scmp.eq.s32.totalorder %s18, 0
      %p116 = por %p114, %p115
      %p117 = scmp.ne.s32.totalorder %s106, %s109
      %p118 = scmp.eq.s32.totalorder %s23, 1
      %p119 = por %p117, %p118
      %p120 = scmp.ne.s32.totalorder %s109, %s110
      %p121 = scmp.eq.s32.totalorder %s23, 0
      %p122 = por %p120, %p121
      %p123 = scmp.ne.s32.totalorder %s109, %s110
      %p124 = scmp.eq.s32.totalorder %s24, 1
      %p125 = por %p123, %p124
      %p127 = scmp.ne.s32.totalorder %s110, %s126
      %p128 = scmp.eq.s32.totalorder %s24, 0
      %p129 = por %p127, %p128
      %p130 = scmp.le.s32.totalorder 1, %s18
      %p131 = scmp.lt.s32.totalorder %s18, 3
      %p132 = pnand %p130, %p131
      %p133 = pneg %p132
      // Predicated region
      $region9: #{tpu_custom_call.1} parent=5 // pred_check
        _
      $region10: #{tpu_custom_call.1} parent=5 // pred_check_branch
        %135 = sbr.rel (%p132) target = $region12
      $region11: #{tpu_custom_call.1} parent=5 // pred_region
        %s136 = ssub.s32 %s18, 1
      $region12: #{tpu_custom_call.1} parent=5 // pred_fallthru
        _
      %p137 = scmp.lt.s32.totalorder %s18, 2
      // Predicated region
      $region13: #{tpu_custom_call.1} parent=5 // pred_check
        %p138 = pneg %p137
      $region14: #{tpu_custom_call.1} parent=5 // pred_check_branch
        %140 = sbr.rel (%p138) target = $region16
      $region15: #{tpu_custom_call.1} parent=5 // pred_region
        // Predicated region
        $region17: #{tpu_custom_call.1} parent=15 // pred_check
          %p141 = pneg %p38
        $region18: #{tpu_custom_call.1} parent=15 // pred_check_branch
          %143 = sbr.rel (%p141) target = $region20
        $region19: #{tpu_custom_call.1} parent=15 // pred_region
          %s144 = sand.u32 %s28, 1
          %s145 = scalar_lea.sflag [#allocation3], %s144
          %s146 = sand.u32 %s28, 1
          %s147 = smul.addr %s146, 256
          %s148 = scalar_lea.vmem [#allocation2], %s147
          %s150 = ssub.s32 4096, 4096
          %151 = vsyncadd %s145, %s150
          %s152 = smul.addr %s18, 128
          %s153 = scalar_lea.hbm %s0, %s152
          %s154 = sshll.u32 %s148, 4
          %s155 = int_to_ptr.vmem [resolvable:$true] %s154
          %160 = dma.hbm_to_vmem [thread:$0]  %s153, 4096, %s155, %s145, 256, 128, 8
        $region20: #{tpu_custom_call.1} parent=15 // pred_fallthru
          _
        // Predicated region
        $region21: #{tpu_custom_call.1} parent=15 // pred_check
          %p161 = pneg %p64
        $region22: #{tpu_custom_call.1} parent=15 // pred_check_branch
          %163 = sbr.rel (%p161) target = $region24
        $region23: #{tpu_custom_call.1} parent=15 // pred_region
          %s164 = sand.u32 %s18, 1
          %s165 = scalar_lea.sflag [#allocation6], %s164
          %s166 = sand.u32 %s54, 1
          %s167 = smul.addr %s166, 16
          %s168 = scalar_lea.vmem [#allocation5], %s167
          %s170 = ssub.s32 256, 256
          %171 = vsyncadd %s165, %s170
          %s172 = smul.addr %s18, 128
          %s173 = scalar_lea.hbm %s1, %s172
          %s174 = sshll.u32 %s168, 4
          %s175 = int_to_ptr.vmem [resolvable:$true] %s174
          %180 = dma.hbm_to_vmem [thread:$0]  %s173, 256, %s175, %s165, 256, 128, 8
        $region24: #{tpu_custom_call.1} parent=15 // pred_fallthru
          _
        // Predicated region
        $region25: #{tpu_custom_call.1} parent=15 // pred_check
          %p181 = pneg %p90
        $region26: #{tpu_custom_call.1} parent=15 // pred_check_branch
          %183 = sbr.rel (%p181) target = $region28
        $region27: #{tpu_custom_call.1} parent=15 // pred_region
          %s184 = sand.u32 %s18, 1
          %s185 = scalar_lea.sflag [#allocation6], %s184
          %s186 = sand.u32 %s80, 1
          %s187 = smul.addr %s186, 32
          %s188 = scalar_lea.vmem [#allocation7], %s187
          %s190 = ssub.s32 512, 512
          %191 = vsyncadd %s185, %s190
          %s192 = smul.addr %s18, 128
          %s193 = scalar_lea.hbm %s2, %s192
          %s194 = sshll.u32 %s188, 4
          %s195 = int_to_ptr.vmem [resolvable:$true] %s194
          %200 = dma.hbm_to_vmem [thread:$0]  %s193, 512, %s195, %s185, 256, 128, 8
        $region28: #{tpu_custom_call.1} parent=15 // pred_fallthru
          _
      $region16: #{tpu_custom_call.1} parent=5 // pred_fallthru
        _
      %p201 = scmp.le.s32.totalorder 1, %s18
      %p202 = scmp.lt.s32.totalorder %s18, 3
      %p203 = pnand %p201, %p202
      %p204 = pneg %p203
      // Predicated region
      $region29: #{tpu_custom_call.1} parent=5 // pred_check
        _
      $region30: #{tpu_custom_call.1} parent=5 // pred_check_branch
        %206 = sbr.rel (%p203) target = $region32
      $region31: #{tpu_custom_call.1} parent=5 // pred_region
        %s207 = ssub.s32 %s18, 1
        %s208 = sand.u32 %s31, 1
        %s209 = scalar_lea.sflag [#allocation3], %s208
        %s210 = sand.u32 %s31, 1
        %s211 = smul.addr %s210, 256
        %s212 = scalar_lea.vmem [#allocation2], %s211
        // Predicated region
        $region33: #{tpu_custom_call.1} parent=31 // pred_check
          %p213 = pneg %p44
        $region34: #{tpu_custom_call.1} parent=31 // pred_check_branch
          %215 = sbr.rel (%p213) target = $region36
        $region35: #{tpu_custom_call.1} parent=31 // pred_region
          %216 = dma.done %s209, 4096
        $region36: #{tpu_custom_call.1} parent=31 // pred_fallthru
          _
        %s217 = sand.u32 %s23, 1
        %s218 = scalar_lea.sflag [#allocation6], %s217
        %s219 = sand.u32 %s57, 1
        %s220 = smul.addr %s219, 16
        %s221 = scalar_lea.vmem [#allocation5], %s220
        // Predicated region
        $region37: #{tpu_custom_call.1} parent=31 // pred_check
          %p222 = pneg %p70
        $region38: #{tpu_custom_call.1} parent=31 // pred_check_branch
          %224 = sbr.rel (%p222) target = $region40
        $region39: #{tpu_custom_call.1} parent=31 // pred_region
          %225 = dma.done %s218, 256
        $region40: #{tpu_custom_call.1} parent=31 // pred_fallthru
          _
        %s226 = sand.u32 %s23, 1
        %s227 = scalar_lea.sflag [#allocation6], %s226
        %s228 = sand.u32 %s83, 1
        %s229 = smul.addr %s228, 32
        %s230 = scalar_lea.vmem [#allocation7], %s229
        // Predicated region
        $region41: #{tpu_custom_call.1} parent=31 // pred_check
          %p231 = pneg %p96
        $region42: #{tpu_custom_call.1} parent=31 // pred_check_branch
          %233 = sbr.rel (%p231) target = $region44
        $region43: #{tpu_custom_call.1} parent=31 // pred_region
          %234 = dma.done %s227, 512
        $region44: #{tpu_custom_call.1} parent=31 // pred_fallthru
          _
        %s235 = sand.u32 %s31, 1
        %s236 = scalar_lea.sflag [#allocation3], %s235
        %s237 = sand.u32 %s31, 1
        %s238 = smul.addr %s237, 256
        %s239 = scalar_lea.vmem [#allocation2], %s238
        %p240 = pneg %p44
        %p241 = pneg %p41
        %s242 = sand.u32 %s23, 1
        %s243 = scalar_lea.sflag [#allocation6], %s242
        %s244 = sand.u32 %s57, 1
        %s245 = smul.addr %s244, 16
        %s246 = scalar_lea.vmem [#allocation5], %s245
        %p247 = pneg %p70
        %p248 = pneg %p67
        %s249 = sand.u32 %s23, 1
        %s250 = scalar_lea.sflag [#allocation6], %s249
        %s251 = sand.u32 %s83, 1
        %s252 = smul.addr %s251, 32
        %s253 = scalar_lea.vmem [#allocation7], %s252
        %p254 = pneg %p96
        %p255 = pneg %p93
        %p256 = pneg %p122
        %p257 = pneg %p119
        %s258 = sand.u32 %s109, 1
        %s259 = scalar_lea.sflag [#allocation4], %s258
        %s260 = sand.u32 %s109, 1
        %s261 = smul.addr %s260, 32
        %s262 = scalar_lea.vmem [#allocation8], %s261
        %v263 = vld [vmem:[%s230] sm:$0xff]
        %v264 = vld [vmem:[%s230 + $0x8] sm:$0xff]
        %s265 = scalar_lea.vmem %s230, 16 [#allocation7]
        %v266 = vld [vmem:[%s265] sm:$0xff]
        %v267 = vld [vmem:[%s265 + $0x8] sm:$0xff]
        %v268 = vld [vmem:[%s212] sm:$0xff]
        %v269 = vld [vmem:[%s212 + $0x8] sm:$0xff]
        %s270 = scalar_lea.vmem %s212, 128 [#allocation2]
        %v271 = vld [vmem:[%s270] sm:$0xff]
        %v272 = vld [vmem:[%s270 + $0x8] sm:$0xff]
        %v273 = vld [vmem:[%s221] sm:$0x1]
        %s274 = scalar_lea.vmem %s221, 8 [#allocation5]
        %v275 = vld [vmem:[%s274] sm:$0x1]
        %v276 = vlaneseq
        %v277 = vshrl.u32 %v276, 7
        %v278 = vsub.s32 0, %v277
        %v279 = vrot.slane %v273, %v278
        %v280 = vmul.f32 %v268, %v279
        %v281 = vmul.f32 %v269, %v279
        %v282 = vadd.f32 %v263, %v280
        %v283 = vadd.f32 %v264, %v281
        %v284 = vlaneseq
        %v285 = vshrl.u32 %v284, 7
        %v286 = vsub.s32 0, %v285
        %v287 = vrot.slane %v275, %v286
        %v288 = vmul.f32 %v271, %v287
        %v289 = vmul.f32 %v272, %v287
        %v290 = vsub.f32 %v282, %v288
        %v291 = vsub.f32 %v283, %v289
        %v292 = vmul.f32 %v268, %v287
        %v293 = vmul.f32 %v269, %v287
        %v294 = vadd.f32 %v266, %v292
        %v295 = vadd.f32 %v267, %v293
        %v296 = vmul.f32 %v271, %v279
        %v297 = vmul.f32 %v272, %v279
        %v298 = vadd.f32 %v294, %v296
        %v299 = vadd.f32 %v295, %v297
        %s300 = scalar_lea.vmem %s212, 16 [#allocation2]
        %v301 = vld [vmem:[%s300] sm:$0xff]
        %v302 = vld [vmem:[%s300 + $0x8] sm:$0xff]
        %s303 = scalar_lea.vmem %s212, 144 [#allocation2]
        %v304 = vld [vmem:[%s303] sm:$0xff]
        %v305 = vld [vmem:[%s303 + $0x8] sm:$0xff]
        %v306 = vld [vmem:[%s221 + $0x1] sm:$0x1]
        %v307 = vld [vmem:[%s274 + $0x1] sm:$0x1]
        %v308 = vlaneseq
        %v309 = vshrl.u32 %v308, 7
        %v310 = vsub.s32 0, %v309
        %v311 = vrot.slane %v306, %v310
        %v312 = vmul.f32 %v301, %v311
        %v313 = vmul.f32 %v302, %v311
        %v314 = vadd.f32 %v290, %v312
        %v315 = vadd.f32 %v291, %v313
        %v316 = vlaneseq
        %v317 = vshrl.u32 %v316, 7
        %v318 = vsub.s32 0, %v317
        %v319 = vrot.slane %v307, %v318
        %v320 = vmul.f32 %v304, %v319
        %v321 = vmul.f32 %v305, %v319
        %v322 = vsub.f32 %v314, %v320
        %v323 = vsub.f32 %v315, %v321
        %v324 = vmul.f32 %v301, %v319
        %v325 = vmul.f32 %v302, %v319
        %v326 = vadd.f32 %v298, %v324
        %v327 = vadd.f32 %v299, %v325
        %v328 = vmul.f32 %v304, %v311
        %v329 = vmul.f32 %v305, %v311
        %v330 = vadd.f32 %v326, %v328
        %v331 = vadd.f32 %v327, %v329
        %s332 = scalar_lea.vmem %s212, 32 [#allocation2]
        %v333 = vld [vmem:[%s332] sm:$0xff]
        %v334 = vld [vmem:[%s332 + $0x8] sm:$0xff]
        %s335 = scalar_lea.vmem %s212, 160 [#allocation2]
        %v336 = vld [vmem:[%s335] sm:$0xff]
        %v337 = vld [vmem:[%s335 + $0x8] sm:$0xff]
        %v338 = vld [vmem:[%s221 + $0x2] sm:$0x1]
        %v339 = vld [vmem:[%s274 + $0x2] sm:$0x1]
        %v340 = vlaneseq
        %v341 = vshrl.u32 %v340, 7
        %v342 = vsub.s32 0, %v341
        %v343 = vrot.slane %v338, %v342
        %v344 = vmul.f32 %v333, %v343
        %v345 = vmul.f32 %v334, %v343
        %v346 = vadd.f32 %v322, %v344
        %v347 = vadd.f32 %v323, %v345
        %v348 = vlaneseq
        %v349 = vshrl.u32 %v348, 7
        %v350 = vsub.s32 0, %v349
        %v351 = vrot.slane %v339, %v350
        %v352 = vmul.f32 %v336, %v351
        %v353 = vmul.f32 %v337, %v351
        %v354 = vsub.f32 %v346, %v352
        %v355 = vsub.f32 %v347, %v353
        %v356 = vmul.f32 %v333, %v351
        %v357 = vmul.f32 %v334, %v351
        %v358 = vadd.f32 %v330, %v356
        %v359 = vadd.f32 %v331, %v357
        %v360 = vmul.f32 %v336, %v343
        %v361 = vmul.f32 %v337, %v343
        %v362 = vadd.f32 %v358, %v360
        %v363 = vadd.f32 %v359, %v361
        %s364 = scalar_lea.vmem %s212, 48 [#allocation2]
        %v365 = vld [vmem:[%s364] sm:$0xff]
        %v366 = vld [vmem:[%s364 + $0x8] sm:$0xff]
        %s367 = scalar_lea.vmem %s212, 176 [#allocation2]
        %v368 = vld [vmem:[%s367] sm:$0xff]
        %v369 = vld [vmem:[%s367 + $0x8] sm:$0xff]
        %v370 = vld [vmem:[%s221 + $0x3] sm:$0x1]
        %v371 = vld [vmem:[%s274 + $0x3] sm:$0x1]
        %v372 = vlaneseq
        %v373 = vshrl.u32 %v372, 7
        %v374 = vsub.s32 0, %v373
        %v375 = vrot.slane %v370, %v374
        %v376 = vmul.f32 %v365, %v375
        %v377 = vmul.f32 %v366, %v375
        %v378 = vadd.f32 %v354, %v376
        %v379 = vadd.f32 %v355, %v377
        %v380 = vlaneseq
        %v381 = vshrl.u32 %v380, 7
        %v382 = vsub.s32 0, %v381
        %v383 = vrot.slane %v371, %v382
        %v384 = vmul.f32 %v368, %v383
        %v385 = vmul.f32 %v369, %v383
        %v386 = vsub.f32 %v378, %v384
        %v387 = vsub.f32 %v379, %v385
        %v388 = vmul.f32 %v365, %v383
        %v389 = vmul.f32 %v366, %v383
        %v390 = vadd.f32 %v362, %v388
        %v391 = vadd.f32 %v363, %v389
        %v392 = vmul.f32 %v368, %v375
        %v393 = vmul.f32 %v369, %v375
        %v394 = vadd.f32 %v390, %v392
        %v395 = vadd.f32 %v391, %v393
        %s396 = scalar_lea.vmem %s212, 64 [#allocation2]
        %v397 = vld [vmem:[%s396] sm:$0xff]
        %v398 = vld [vmem:[%s396 + $0x8] sm:$0xff]
        %s399 = scalar_lea.vmem %s212, 192 [#allocation2]
        %v400 = vld [vmem:[%s399] sm:$0xff]
        %v401 = vld [vmem:[%s399 + $0x8] sm:$0xff]
        %v402 = vld [vmem:[%s221 + $0x4] sm:$0x1]
        %v403 = vld [vmem:[%s274 + $0x4] sm:$0x1]
        %v404 = vlaneseq
        %v405 = vshrl.u32 %v404, 7
        %v406 = vsub.s32 0, %v405
        %v407 = vrot.slane %v402, %v406
        %v408 = vmul.f32 %v397, %v407
        %v409 = vmul.f32 %v398, %v407
        %v410 = vadd.f32 %v386, %v408
        %v411 = vadd.f32 %v387, %v409
        %v412 = vlaneseq
        %v413 = vshrl.u32 %v412, 7
        %v414 = vsub.s32 0, %v413
        %v415 = vrot.slane %v403, %v414
        %v416 = vmul.f32 %v400, %v415
        %v417 = vmul.f32 %v401, %v415
        %v418 = vsub.f32 %v410, %v416
        %v419 = vsub.f32 %v411, %v417
        %v420 = vmul.f32 %v397, %v415
        %v421 = vmul.f32 %v398, %v415
        %v422 = vadd.f32 %v394, %v420
        %v423 = vadd.f32 %v395, %v421
        %v424 = vmul.f32 %v400, %v407
        %v425 = vmul.f32 %v401, %v407
        %v426 = vadd.f32 %v422, %v424
        %v427 = vadd.f32 %v423, %v425
        %s428 = scalar_lea.vmem %s212, 80 [#allocation2]
        %v429 = vld [vmem:[%s428] sm:$0xff]
        %v430 = vld [vmem:[%s428 + $0x8] sm:$0xff]
        %s431 = scalar_lea.vmem %s212, 208 [#allocation2]
        %v432 = vld [vmem:[%s431] sm:$0xff]
        %v433 = vld [vmem:[%s431 + $0x8] sm:$0xff]
        %v434 = vld [vmem:[%s221 + $0x5] sm:$0x1]
        %v435 = vld [vmem:[%s274 + $0x5] sm:$0x1]
        %v436 = vlaneseq
        %v437 = vshrl.u32 %v436, 7
        %v438 = vsub.s32 0, %v437
        %v439 = vrot.slane %v434, %v438
        %v440 = vmul.f32 %v429, %v439
        %v441 = vmul.f32 %v430, %v439
        %v442 = vadd.f32 %v418, %v440
        %v443 = vadd.f32 %v419, %v441
        %v444 = vlaneseq
        %v445 = vshrl.u32 %v444, 7
        %v446 = vsub.s32 0, %v445
        %v447 = vrot.slane %v435, %v446
        %v448 = vmul.f32 %v432, %v447
        %v449 = vmul.f32 %v433, %v447
        %v450 = vsub.f32 %v442, %v448
        %v451 = vsub.f32 %v443, %v449
        %v452 = vmul.f32 %v429, %v447
        %v453 = vmul.f32 %v430, %v447
        %v454 = vadd.f32 %v426, %v452
        %v455 = vadd.f32 %v427, %v453
        %v456 = vmul.f32 %v432, %v439
        %v457 = vmul.f32 %v433, %v439
        %v458 = vadd.f32 %v454, %v456
        %v459 = vadd.f32 %v455, %v457
        %s460 = scalar_lea.vmem %s212, 96 [#allocation2]
        %v461 = vld [vmem:[%s460] sm:$0xff]
        %v462 = vld [vmem:[%s460 + $0x8] sm:$0xff]
        %s463 = scalar_lea.vmem %s212, 224 [#allocation2]
        %v464 = vld [vmem:[%s463] sm:$0xff]
        %v465 = vld [vmem:[%s463 + $0x8] sm:$0xff]
        %v466 = vld [vmem:[%s221 + $0x6] sm:$0x1]
        %v467 = vld [vmem:[%s274 + $0x6] sm:$0x1]
        %v468 = vlaneseq
        %v469 = vshrl.u32 %v468, 7
        %v470 = vsub.s32 0, %v469
        %v471 = vrot.slane %v466, %v470
        %v472 = vmul.f32 %v461, %v471
        %v473 = vmul.f32 %v462, %v471
        %v474 = vadd.f32 %v450, %v472
        %v475 = vadd.f32 %v451, %v473
        %v476 = vlaneseq
        %v477 = vshrl.u32 %v476, 7
        %v478 = vsub.s32 0, %v477
        %v479 = vrot.slane %v467, %v478
        %v480 = vmul.f32 %v464, %v479
        %v481 = vmul.f32 %v465, %v479
        %v482 = vsub.f32 %v474, %v480
        %v483 = vsub.f32 %v475, %v481
        %v484 = vmul.f32 %v461, %v479
        %v485 = vmul.f32 %v462, %v479
        %v486 = vadd.f32 %v458, %v484
        %v487 = vadd.f32 %v459, %v485
        %v488 = vmul.f32 %v464, %v471
        %v489 = vmul.f32 %v465, %v471
        %v490 = vadd.f32 %v486, %v488
        %v491 = vadd.f32 %v487, %v489
        %s492 = scalar_lea.vmem %s212, 112 [#allocation2]
        %v493 = vld [vmem:[%s492] sm:$0xff]
        %v494 = vld [vmem:[%s492 + $0x8] sm:$0xff]
        %s495 = scalar_lea.vmem %s212, 240 [#allocation2]
        %v496 = vld [vmem:[%s495] sm:$0xff]
        %v497 = vld [vmem:[%s495 + $0x8] sm:$0xff]
        %v498 = vld [vmem:[%s221 + $0x7] sm:$0x1]
        %v499 = vld [vmem:[%s274 + $0x7] sm:$0x1]
        %v500 = vlaneseq
        %v501 = vshrl.u32 %v500, 7
        %v502 = vsub.s32 0, %v501
        %v503 = vrot.slane %v498, %v502
        %v504 = vmul.f32 %v493, %v503
        %v505 = vmul.f32 %v494, %v503
        %v506 = vadd.f32 %v482, %v504
        %v507 = vadd.f32 %v483, %v505
        %v508 = vlaneseq
        %v509 = vshrl.u32 %v508, 7
        %v510 = vsub.s32 0, %v509
        %v511 = vrot.slane %v499, %v510
        %v512 = vmul.f32 %v496, %v511
        %v513 = vmul.f32 %v497, %v511
        %v514 = vsub.f32 %v506, %v512
        %v515 = vsub.f32 %v507, %v513
        %v516 = vmul.f32 %v493, %v511
        %v517 = vmul.f32 %v494, %v511
        %v518 = vadd.f32 %v490, %v516
        %v519 = vadd.f32 %v491, %v517
        %v520 = vmul.f32 %v496, %v503
        %v521 = vmul.f32 %v497, %v503
        %v522 = vadd.f32 %v518, %v520
        %v523 = vadd.f32 %v519, %v521
        %524 = vst [vmem:[%s262] sm:$0xff] %v514
        %525 = vst [vmem:[%s262 + $0x8] sm:$0xff] %v515
        %s526 = scalar_lea.vmem %s262, 16 [#allocation8]
        %527 = vst [vmem:[%s526] sm:$0xff] %v522
        %528 = vst [vmem:[%s526 + $0x8] sm:$0xff] %v523
        %s529 = sand.u32 %s109, 1
        %s530 = scalar_lea.sflag [#allocation4], %s529
        %s531 = sand.u32 %s109, 1
        %s532 = smul.addr %s531, 32
        %s533 = scalar_lea.vmem [#allocation8], %s532
        // Predicated region
        $region45: #{tpu_custom_call.1} parent=31 // pred_check
          %p534 = pneg %p119
        $region46: #{tpu_custom_call.1} parent=31 // pred_check_branch
          %536 = sbr.rel (%p534) target = $region48
        $region47: #{tpu_custom_call.1} parent=31 // pred_region
          %s538 = ssub.s32 512, 512
          %539 = vsyncadd %s530, %s538
          %s540 = smul.addr %s23, 128
          %s541 = scalar_lea.hbm %s3, %s540
          %s542 = sshll.u32 %s533, 4
          %s543 = int_to_ptr.vmem [resolvable:$true] %s542
          %548 = dma.vmem_to_hbm [thread:$0]  %s543, 512, %s541, %s530, 128, 256, 8
        $region48: #{tpu_custom_call.1} parent=31 // pred_fallthru
          _
      $region32: #{tpu_custom_call.1} parent=5 // pred_fallthru
        _
      %p549 = scmp.le.s32.totalorder 2, %s18
      // Predicated region
      $region49: #{tpu_custom_call.1} parent=5 // pred_check
        %p550 = pneg %p549
      $region50: #{tpu_custom_call.1} parent=5 // pred_check_branch
        %552 = sbr.rel (%p550) target = $region52
      $region51: #{tpu_custom_call.1} parent=5 // pred_region
        %s553 = ssub.s32 %s18, 2
        // Predicated region
        $region53: #{tpu_custom_call.1} parent=51 // pred_check
          %p554 = pneg %p125
        $region54: #{tpu_custom_call.1} parent=51 // pred_check_branch
          %556 = sbr.rel (%p554) target = $region56
        $region55: #{tpu_custom_call.1} parent=51 // pred_region
          %s557 = sand.u32 %s110, 1
          %s558 = scalar_lea.sflag [#allocation4], %s557
          %s559 = sand.u32 %s110, 1
          %s560 = smul.addr %s559, 32
          %s561 = scalar_lea.vmem [#allocation8], %s560
          %562 = dma.done %s558, 512
        $region56: #{tpu_custom_call.1} parent=51 // pred_fallthru
          _
      $region52: #{tpu_custom_call.1} parent=5 // pred_fallthru
        _
    $region6: #{tpu_custom_call.1} parent=1 // loop_footer
      %s22 = sadd.s32 1, %s18
    $region7: #{tpu_custom_call.1} parent=1 // loop_footer_branch
      %17 = sbr.rel target = $region3
    $region8: #{tpu_custom_call.1} parent=1 // loop_exit
      _
    %563 = vsyncpa [#allocation3], 1
    %s564 = scalar_lea.sflag [#allocation3], 1
    %565 = vsyncpa %s564, 1
    %566 = vsyncpa [#allocation6], 1
    %s567 = scalar_lea.sflag [#allocation6], 1
    %568 = vsyncpa %s567, 1
    %569 = vsyncpa [#allocation4], 1
    %s570 = scalar_lea.sflag [#allocation4], 1
    %571 = vsyncpa %s570, 1

</llo_original>
